<compile_context>
chip_gen: v7x
topology: tpu7x:2x2x1
jax: 0.10.0
libtpu: 0.0.40
codegen_flags: <defaults>
</compile_context>

<pallas_src>
import jax
import jax.numpy as jnp
from jax.experimental import pallas as pl
from jax.experimental.pallas import tpu as pltpu


def _round_up(n, m):
    return ((n + m - 1) // m) * m


def _choose_tile(B, tb_max):
    """Batch tile: multiple of 16, big enough to amortize per-step overhead,
    small enough that there are >= 2 grid steps whenever B allows (v7x has 2
    TensorCores; on v5e/v6e the cap is a no-op)."""
    half = _round_up(pl.cdiv(B, 2), 16)
    tb = min(_round_up(tb_max, 16), half)
    return max(tb, 16)


def _fastthinknet_kernel(x_ref, w1_ref, b1_ref, w2_ref, b2_ref, o_ref):
    # fc1: cast the streamed activation tile to bf16 on-chip (no-op if the
    # caller already keeps activations in bf16); bf16 MXU path, f32 accumulate.
    xb = x_ref[...].astype(jnp.bfloat16)
    h = jnp.dot(xb, w1_ref[...], preferred_element_type=jnp.float32)
    # Bias + ReLU in f32 on the VPU (keeps v5e on its supported f32 path).
    h = jnp.maximum(h + b1_ref[...], 0.0)
    # fc2: small hidden activation back to bf16 for the MXU; f32 accumulate.
    out = jnp.dot(h.astype(jnp.bfloat16), w2_ref[...],
                  preferred_element_type=jnp.float32)
    o_ref[...] = (out + b2_ref[...]).astype(o_ref.dtype)


def fastthinknet_forward(x, w1, b1, w2, b2, *, tb_max=2048):
    """x: any shape whose flattened trailing dims give 784 features
    (e.g. [B,1,28,28]), f32 or bf16.  w1: [784,128], b1: [128],
    w2: [128,10], b2: [10].  Returns f32 logits [B, 10]."""
    x2d = x.reshape(-1, 784)                      # x.view(-1, 784) — metadata only
    B = x2d.shape[0]
    x_bytes = jnp.dtype(x2d.dtype).itemsize

    tb = _choose_tile(B, tb_max)
    grid = (pl.cdiv(B, tb),)                      # partial last tile handled by Pallas

    # Weights/biases are tiny; one-time bf16/f32 casts are negligible traffic.
    w1b = w1.astype(jnp.bfloat16)
    w2b = w2.astype(jnp.bfloat16)
    b1_2d = b1.reshape(1, 128).astype(jnp.float32)
    b2_2d = b2.reshape(1, 10).astype(jnp.float32)

    # Derived VMEM budget: double-buffered x + out, resident weights (also
    # double-buffered by the pipeline), fc1 intermediates, plus headroom for
    # compiler-internal scratch.
    weight_bytes = 784 * 128 * 2 + 128 * 4 + 128 * 10 * 2 + 10 * 4
    vmem_need = (2 * tb * 784 * x_bytes           # x tiles
                 + 2 * tb * 10 * 4                # out tiles
                 + 2 * weight_bytes               # resident params
                 + tb * 128 * (4 + 2))            # h (f32) + h (bf16)
    vmem_limit = min(max(int(vmem_need * 3 // 2) + (2 << 20), 16 << 20), 48 << 20)

    flops = 2 * B * 784 * 128 + 2 * B * 128 * 10
    bytes_accessed = (B * 784 * x_bytes           # x stream (dominant)
                      + weight_bytes              # params (fetched once)
                      + B * 10 * 4)               # output

    return pl.pallas_call(
        _fastthinknet_kernel,
        out_shape=jax.ShapeDtypeStruct((B, 10), jnp.float32),
        grid=grid,
        in_specs=[
            # x: streamed per batch tile (double-buffered by the pipeline).
            pl.BlockSpec((tb, 784), lambda i: (i, 0)),
            # Params: same block every step -> VMEM-resident, fetched once.
            pl.BlockSpec((784, 128), lambda i: (0, 0)),
            pl.BlockSpec((1, 128), lambda i: (0, 0)),
            pl.BlockSpec((128, 10), lambda i: (0, 0)),
            pl.BlockSpec((1, 10), lambda i: (0, 0)),
        ],
        out_specs=pl.BlockSpec((tb, 10), lambda i: (i, 0)),
        compiler_params=pltpu.CompilerParams(
            dimension_semantics=("parallel",),    # independent batch tiles
            vmem_limit_bytes=vmem_limit,
        ),
        cost_estimate=pl.CostEstimate(
            flops=flops, transcendentals=0, bytes_accessed=bytes_accessed),
    )(x2d, w1b, b1_2d, w2b, b2_2d)


def init_params(key):
    """nn.Linear(784,128) / nn.Linear(128,10) shapes, weights stored [in, out]."""
    k1, k2, k3, k4 = jax.random.split(key, 4)
    lim1 = 1.0 / jnp.sqrt(784.0)
    lim2 = 1.0 / jnp.sqrt(128.0)
    w1 = jax.random.uniform(k1, (784, 128), jnp.float32, -lim1, lim1)
    b1 = jax.random.uniform(k2, (128,), jnp.float32, -lim1, lim1)
    w2 = jax.random.uniform(k3, (128, 10), jnp.float32, -lim2, lim2)
    b2 = jax.random.uniform(k4, (10,), jnp.float32, -lim2, lim2)
    return w1, b1, w2, b2


def _reference(x, w1, b1, w2, b2):
    """Pure-JAX reference with the same bf16-operand / f32-accumulate semantics.
    NOTE: bf16 MXU operands make this ~2-3 digits looser than the f32 PyTorch
    module; acceptable for this workload, checked at 2e-2 tolerance."""
    x2d = x.reshape(-1, 784).astype(jnp.bfloat16)
    h = jnp.dot(x2d, w1.astype(jnp.bfloat16),
                preferred_element_type=jnp.float32) + b1
    h = jnp.maximum(h, 0.0)
    out = jnp.dot(h.astype(jnp.bfloat16), w2.astype(jnp.bfloat16),
                  preferred_element_type=jnp.float32) + b2
    return out


if __name__ == "__main__":
    key = jax.random.PRNGKey(0)
    kx, kp = jax.random.split(key)
    w1, b1, w2, b2 = init_params(kp)

    # Small, module-consistent input: NCHW [8, 1, 28, 28] f32 -> 784 features.
    x = jax.random.normal(kx, (8, 1, 28, 28), dtype=jnp.float32)
    out = jax.block_until_ready(fastthinknet_forward(x, w1, b1, w2, b2))
    assert out.shape == (8, 10)
    ref = _reference(x, w1, b1, w2, b2)
    assert jnp.allclose(out, ref, atol=2e-2, rtol=2e-2), float(
        jnp.max(jnp.abs(out - ref)))

    # Second check: bf16 activations kept upstream (no wrapper cast), batch
    # not a multiple of the tile -> multi-step grid with a masked partial
    # last tile (tb=16, grid=(2,) for B=20).
    x2 = jax.random.normal(
        jax.random.PRNGKey(1), (20, 1, 28, 28), jnp.float32).astype(jnp.bfloat16)
    out2 = jax.block_until_ready(
        fastthinknet_forward(x2, w1, b1, w2, b2, tb_max=16))
    ref2 = _reference(x2, w1, b1, w2, b2)
    assert out2.shape == (20, 10)
    assert jnp.allclose(out2, ref2, atol=2e-2, rtol=2e-2), float(
        jnp.max(jnp.abs(out2 - ref2)))

    print("KERNEL_OK")
</pallas_src>

<mosaic_0001>
module attributes {stable_mosaic.version = 11 : i64} {
  func.func @_fastthinknet_kernel(%arg0: i32, %arg1: memref<16x784xf32, #tpu.memory_space<vmem>>, %arg2: memref<784x128xbf16, #tpu.memory_space<vmem>>, %arg3: memref<1x128xf32, #tpu.memory_space<vmem>>, %arg4: memref<128x10xbf16, #tpu.memory_space<vmem>>, %arg5: memref<1x10xf32, #tpu.memory_space<vmem>>, %arg6: memref<16x10xf32, #tpu.memory_space<vmem>>) attributes {dimension_semantics = [#tpu.dimension_semantics<parallel>], iteration_bounds = array<i64: 1>, scalar_prefetch = 0 : i64, scratch_operands = 0 : i64, tpu.core_type = #tpu.core_type<tc>, window_params = [{transform_indices = @transform_0, window_bounds = array<i64: 16, 784>}, {pipeline_mode = #tpu.pipeline_mode<synchronous>, transform_indices = @transform_1, window_bounds = array<i64: 784, 128>}, {pipeline_mode = #tpu.pipeline_mode<synchronous>, transform_indices = @transform_2, window_bounds = array<i64: 1, 128>}, {pipeline_mode = #tpu.pipeline_mode<synchronous>, transform_indices = @transform_3, window_bounds = array<i64: 128, 10>}, {pipeline_mode = #tpu.pipeline_mode<synchronous>, transform_indices = @transform_4, window_bounds = array<i64: 1, 10>}, {transform_indices = @transform_5, window_bounds = array<i64: 16, 10>}]} {
    %c0 = arith.constant 0 : index
    %c0_0 = arith.constant 0 : index
    %0 = vector.load %arg1[%c0, %c0_0] : memref<16x784xf32, #tpu.memory_space<vmem>>, vector<16x784xf32>
    %1 = arith.truncf %0 : vector<16x784xf32> to vector<16x784xbf16>
    %c0_1 = arith.constant 0 : index
    %c0_2 = arith.constant 0 : index
    %2 = vector.load %arg2[%c0_1, %c0_2] : memref<784x128xbf16, #tpu.memory_space<vmem>>, vector<784x128xbf16>
    %cst = arith.constant dense<0.000000e+00> : vector<16x128xf32>
    %3 = tpu.matmul %1, %2, %cst {dimension_numbers = #tpu.dot_dimension_numbers<[1], [0], [0], [1], [0, 0, 1, 1], [], []>} : vector<16x784xbf16>, vector<784x128xbf16>, vector<16x128xf32> -> vector<16x128xf32>
    %c0_3 = arith.constant 0 : index
    %c0_4 = arith.constant 0 : index
    %4 = vector.load %arg3[%c0_3, %c0_4] : memref<1x128xf32, #tpu.memory_space<vmem>>, vector<1x128xf32>
    %5 = vector.broadcast %4 : vector<1x128xf32> to vector<16x128xf32>
    %6 = arith.addf %3, %5 : vector<16x128xf32>
    %cst_5 = arith.constant 0.000000e+00 : f32
    %7 = vector.broadcast %cst_5 : f32 to vector<16x128xf32>
    %8 = arith.maximumf %6, %7 : vector<16x128xf32>
    %9 = arith.truncf %8 : vector<16x128xf32> to vector<16x128xbf16>
    %c0_6 = arith.constant 0 : index
    %c0_7 = arith.constant 0 : index
    %10 = vector.load %arg4[%c0_6, %c0_7] : memref<128x10xbf16, #tpu.memory_space<vmem>>, vector<128x10xbf16>
    %cst_8 = arith.constant dense<0.000000e+00> : vector<16x10xf32>
    %11 = tpu.matmul %9, %10, %cst_8 {dimension_numbers = #tpu.dot_dimension_numbers<[1], [0], [0], [1], [0, 0, 1, 1], [], []>} : vector<16x128xbf16>, vector<128x10xbf16>, vector<16x10xf32> -> vector<16x10xf32>
    %c0_9 = arith.constant 0 : index
    %c0_10 = arith.constant 0 : index
    %12 = vector.load %arg5[%c0_9, %c0_10] : memref<1x10xf32, #tpu.memory_space<vmem>>, vector<1x10xf32>
    %13 = vector.broadcast %12 : vector<1x10xf32> to vector<16x10xf32>
    %14 = arith.addf %11, %13 : vector<16x10xf32>
    %c0_11 = arith.constant 0 : index
    %c0_12 = arith.constant 0 : index
    %15 = vector.load %arg6[%c0_11, %c0_12] : memref<16x10xf32, #tpu.memory_space<vmem>>, vector<16x10xf32>
    tpu.vector_store %arg6[%c0_11, %c0_12], %14 {strides = array<i32>} : memref<16x10xf32, #tpu.memory_space<vmem>>, vector<16x10xf32>,
    return
  }
  func.func @transform_0(%arg0: i32) -> (i32, i32) {
    %c0_i32 = arith.constant 0 : i32
    %c0_i32_0 = arith.constant 0 : i32
    return %arg0, %c0_i32 : i32, i32
  }
  func.func @transform_1(%arg0: i32) -> (i32, i32) {
    %c0_i32 = arith.constant 0 : i32
    %c0_i32_0 = arith.constant 0 : i32
    %c0_i32_1 = arith.constant 0 : i32
    return %c0_i32, %c0_i32_0 : i32, i32
  }
  func.func @transform_2(%arg0: i32) -> (i32, i32) {
    %c0_i32 = arith.constant 0 : i32
    %c0_i32_0 = arith.constant 0 : i32
    %c0_i32_1 = arith.constant 0 : i32
    return %c0_i32, %c0_i32_0 : i32, i32
  }
  func.func @transform_3(%arg0: i32) -> (i32, i32) {
    %c0_i32 = arith.constant 0 : i32
    %c0_i32_0 = arith.constant 0 : i32
    %c0_i32_1 = arith.constant 0 : i32
    return %c0_i32, %c0_i32_0 : i32, i32
  }
  func.func @transform_4(%arg0: i32) -> (i32, i32) {
    %c0_i32 = arith.constant 0 : i32
    %c0_i32_0 = arith.constant 0 : i32
    %c0_i32_1 = arith.constant 0 : i32
    return %c0_i32, %c0_i32_0 : i32, i32
  }
  func.func @transform_5(%arg0: i32) -> (i32, i32) {
    %c0_i32 = arith.constant 0 : i32
    %c0_i32_0 = arith.constant 0 : i32
    return %arg0, %c0_i32 : i32, i32
  }
}

</mosaic_0001>

<llo_original>
// kernel: tpu_custom_call.1
$region0: #{tpu_custom_call.1}
  #allocation0 [shape = 'u32[]', space=smem, size = 0x4, offset = 0x4, fixed_abs, tag = 'smem constant byte address 0x4 - core index']
  #allocation1 [shape = 'u32[144,128]{1,0:T(1,128)}', space=vmem, size = 0x12000, scoped, tag = 'internal scratch']
  %s0 = inlined_call_operand.vmem [shape: f32[8,784], index: 0, kind: input, shape index: {}]
  %s1 = inlined_call_operand.hbm [shape: bf16[784,128], index: 1, kind: input, shape index: {}]
  %s2 = inlined_call_operand.vmem [shape: f32[1,128], index: 2, kind: input, shape index: {}]
  %s3 = inlined_call_operand.vmem [shape: bf16[128,10], index: 3, kind: input, shape index: {}]
  %s4 = inlined_call_operand.vmem [shape: f32[1,10], index: 4, kind: input, shape index: {}]
  %s5 = inlined_call_operand.hbm [shape: f32[8,10], index: 5, kind: output, shape index: {}]
  %s6 = sld [smem:[#allocation0]]
  $region34: #{tpu_custom_call.1} parent=0
    _
  %s8 = ssub.s32 1, %s6
  %s9 = scalar_select 0, %s8, %s6
  $region1: #{tpu_custom_call.1} parent=0
    #allocation2 [shape = 'u8[200704]{0}', space=vmem, size = 0x31000, scoped, tag = 'input window, operand 1, single buffered']
    #allocation3 [shape = 's32[1]{0}', space=sflag, size = 0x4, scoped, tag = 'scoped memory for tpu_custom_call.1']
    #allocation4 [shape = 's32[1]{0}', space=sflag, size = 0x4, scoped, tag = 'scoped memory for tpu_custom_call.1']
    #allocation5 [shape = 'u8[8192]{0}', space=vmem, size = 0x2000, scoped, tag = 'output window, operand 0, single buffered']
    %10 = vsyncpa [#allocation3], 0
    %11 = vsyncpa [#allocation4], 0
    // Predicated region
    $region2: #{tpu_custom_call.1} parent=1 // pred_check
      _
    $region3: #{tpu_custom_call.1} parent=1 // pred_check_branch
      %13 = sbr.rel (0) target = $region5
    $region4: #{tpu_custom_call.1} parent=1 // pred_region
      _
    $region5: #{tpu_custom_call.1} parent=1 // pred_fallthru
      _
    // Predicated region
    $region6: #{tpu_custom_call.1} parent=1 // pred_check
      _
    $region7: #{tpu_custom_call.1} parent=1 // pred_check_branch
      %15 = sbr.rel (0) target = $region9
    $region8: #{tpu_custom_call.1} parent=1 // pred_region
      %s17 = ssub.s32 6272, 6272
      %18 = vsyncadd [#allocation3], %s17
      %s19 = sshll.u32 [#allocation2], 4
      %s20 = int_to_ptr.vmem [resolvable:$true] %s19
      %25 = dma.hbm_to_vmem [thread:$0]  %s1, 6272, %s20, [#allocation3], 64, 64, 4
    $region9: #{tpu_custom_call.1} parent=1 // pred_fallthru
      _
    // Predicated region
    $region10: #{tpu_custom_call.1} parent=1 // pred_check
      _
    $region11: #{tpu_custom_call.1} parent=1 // pred_check_branch
      %27 = sbr.rel (0) target = $region13
    $region12: #{tpu_custom_call.1} parent=1 // pred_region
      _
    $region13: #{tpu_custom_call.1} parent=1 // pred_fallthru
      _
    // Predicated region
    $region14: #{tpu_custom_call.1} parent=1 // pred_check
      _
    $region15: #{tpu_custom_call.1} parent=1 // pred_check_branch
      %29 = sbr.rel (0) target = $region17
    $region16: #{tpu_custom_call.1} parent=1 // pred_region
      _
    $region17: #{tpu_custom_call.1} parent=1 // pred_fallthru
      _
    // Predicated region
    $region18: #{tpu_custom_call.1} parent=1 // pred_check
      _
    $region19: #{tpu_custom_call.1} parent=1 // pred_check_branch
      %31 = sbr.rel (0) target = $region21
    $region20: #{tpu_custom_call.1} parent=1 // pred_region
      _
    $region21: #{tpu_custom_call.1} parent=1 // pred_fallthru
      _
    // Predicated region
    $region22: #{tpu_custom_call.1} parent=1 // pred_check
      _
    $region23: #{tpu_custom_call.1} parent=1 // pred_check_branch
      %33 = sbr.rel (0) target = $region25
    $region24: #{tpu_custom_call.1} parent=1 // pred_region
      %34 = dma.done [#allocation3], 6272
    $region25: #{tpu_custom_call.1} parent=1 // pred_fallthru
      _
    %v36 = vld [vmem:[%s0] sm:$0xff]
    %v37 = vld [vmem:[%s0 + $0x8] sm:$0xff]
    %v38 = vld [vmem:[%s0 + $0x10] sm:$0xff]
    %v39 = vld [vmem:[%s0 + $0x18] sm:$0xff]
    %v40 = vld [vmem:[%s0 + $0x20] sm:$0xff]
    %v41 = vld [vmem:[%s0 + $0x28] sm:$0xff]
    %v42 = vld [vmem:[%s0 + $0x30] sm:$0xff]
    %v43 = vld [vmem:[%s0 + $0x38] sm:$0xff]
    %v44 = vld [vmem:[%s0 + $0x40] sm:$0xff]
    %v45 = vld [vmem:[%s0 + $0x48] sm:$0xff]
    %v46 = vld [vmem:[%s0 + $0x50] sm:$0xff]
    %v47 = vld [vmem:[%s0 + $0x58] sm:$0xff]
    %v48 = vld [vmem:[%s0 + $0x60] sm:$0xff]
    %v49 = vld [vmem:[%s0 + $0x68] sm:$0xff]
    %v50 = vpack.c.bf16 %v43, %v36
    %v51 = vpack.c.bf16 %v44, %v37
    %v52 = vpack.c.bf16 %v45, %v38
    %v53 = vpack.c.bf16 %v46, %v39
    %v54 = vpack.c.bf16 %v47, %v40
    %v55 = vpack.c.bf16 %v48, %v41
    %v56 = vpack.c.bf16 %v49, %v42
    %v57 = vld [vmem:[#allocation2] sm:$0xf]
    %v58 = vld [vmem:[#allocation2 + $0x4] sm:$0xf]
    %v59 = vld [vmem:[#allocation2 + $0x8] sm:$0xf]
    %v60 = vld [vmem:[#allocation2 + $0xc] sm:$0xf]
    %v61 = vld [vmem:[#allocation2 + $0x10] sm:$0xf]
    %v62 = vld [vmem:[#allocation2 + $0x14] sm:$0xf]
    %v63 = vld [vmem:[#allocation2 + $0x18] sm:$0xf]
    %v64 = vld [vmem:[#allocation2 + $0x1c] sm:$0xf]
    %v65 = vld [vmem:[#allocation2 + $0x20] sm:$0xf]
    %v66 = vld [vmem:[#allocation2 + $0x24] sm:$0xf]
    %v67 = vld [vmem:[#allocation2 + $0x28] sm:$0xf]
    %v68 = vld [vmem:[#allocation2 + $0x2c] sm:$0xf]
    %v69 = vld [vmem:[#allocation2 + $0x30] sm:$0xf]
    %v70 = vld [vmem:[#allocation2 + $0x34] sm:$0xf]
    %v71 = vld [vmem:[#allocation2 + $0x38] sm:$0xf]
    %v72 = vld [vmem:[#allocation2 + $0x3c] sm:$0xf]
    %v73 = vld [vmem:[#allocation2 + $0x40] sm:$0xf]
    %v74 = vld [vmem:[#allocation2 + $0x44] sm:$0xf]
    %v75 = vld [vmem:[#allocation2 + $0x48] sm:$0xf]
    %v76 = vld [vmem:[#allocation2 + $0x4c] sm:$0xf]
    %v77 = vld [vmem:[#allocation2 + $0x50] sm:$0xf]
    %v78 = vld [vmem:[#allocation2 + $0x54] sm:$0xf]
    %v79 = vld [vmem:[#allocation2 + $0x58] sm:$0xf]
    %v80 = vld [vmem:[#allocation2 + $0x5c] sm:$0xf]
    %v81 = vld [vmem:[#allocation2 + $0x60] sm:$0xf]
    %v82 = vld [vmem:[#allocation2 + $0x64] sm:$0xf]
    %v83 = vld [vmem:[#allocation2 + $0x68] sm:$0xf]
    %v84 = vld [vmem:[#allocation2 + $0x6c] sm:$0xf]
    %v85 = vld [vmem:[#allocation2 + $0x70] sm:$0xf]
    %v86 = vld [vmem:[#allocation2 + $0x74] sm:$0xf]
    %v87 = vld [vmem:[#allocation2 + $0x78] sm:$0xf]
    %v88 = vld [vmem:[#allocation2 + $0x7c] sm:$0xf]
    %v89 = vld [vmem:[#allocation2 + $0x80] sm:$0xf]
    %v90 = vld [vmem:[#allocation2 + $0x84] sm:$0xf]
    %v91 = vld [vmem:[#allocation2 + $0x88] sm:$0xf]
    %v92 = vld [vmem:[#allocation2 + $0x8c] sm:$0xf]
    %v93 = vld [vmem:[#allocation2 + $0x90] sm:$0xf]
    %v94 = vld [vmem:[#allocation2 + $0x94] sm:$0xf]
    %v95 = vld [vmem:[#allocation2 + $0x98] sm:$0xf]
    %v96 = vld [vmem:[#allocation2 + $0x9c] sm:$0xf]
    %v97 = vld [vmem:[#allocation2 + $0xa0] sm:$0xf]
    %v98 = vld [vmem:[#allocation2 + $0xa4] sm:$0xf]
    %v99 = vld [vmem:[#allocation2 + $0xa8] sm:$0xf]
    %v100 = vld [vmem:[#allocation2 + $0xac] sm:$0xf]
    %v101 = vld [vmem:[#allocation2 + $0xb0] sm:$0xf]
    %v102 = vld [vmem:[#allocation2 + $0xb4] sm:$0xf]
    %v103 = vld [vmem:[#allocation2 + $0xb8] sm:$0xf]
    %v104 = vld [vmem:[#allocation2 + $0xbc] sm:$0xf]
    %v105 = vld [vmem:[#allocation2 + $0xc0] sm:$0xf]
    %v106 = vld [vmem:[#allocation2 + $0xc4] sm:$0xf]
    %v107 = vld [vmem:[#allocation2 + $0xc8] sm:$0xf]
    %v108 = vld [vmem:[#allocation2 + $0xcc] sm:$0xf]
    %v109 = vld [vmem:[#allocation2 + $0xd0] sm:$0xf]
    %v110 = vld [vmem:[#allocation2 + $0xd4] sm:$0xf]
    %v111 = vld [vmem:[#allocation2 + $0xd8] sm:$0xf]
    %v112 = vld [vmem:[#allocation2 + $0xdc] sm:$0xf]
    %v113 = vld [vmem:[#allocation2 + $0xe0] sm:$0xf]
    %v114 = vld [vmem:[#allocation2 + $0xe4] sm:$0xf]
    %v115 = vld [vmem:[#allocation2 + $0xe8] sm:$0xf]
    %v116 = vld [vmem:[#allocation2 + $0xec] sm:$0xf]
    %v117 = vld [vmem:[#allocation2 + $0xf0] sm:$0xf]
    %v118 = vld [vmem:[#allocation2 + $0xf4] sm:$0xf]
    %v119 = vld [vmem:[#allocation2 + $0xf8] sm:$0xf]
    %v120 = vld [vmem:[#allocation2 + $0xfc] sm:$0xf]
    %v121 = vld [vmem:[#allocation2 + $0x100] sm:$0xf]
    %v122 = vld [vmem:[#allocation2 + $0x104] sm:$0xf]
    %v123 = vld [vmem:[#allocation2 + $0x108] sm:$0xf]
    %v124 = vld [vmem:[#allocation2 + $0x10c] sm:$0xf]
    %v125 = vld [vmem:[#allocation2 + $0x110] sm:$0xf]
    %v126 = vld [vmem:[#allocation2 + $0x114] sm:$0xf]
    %v127 = vld [vmem:[#allocation2 + $0x118] sm:$0xf]
    %v128 = vld [vmem:[#allocation2 + $0x11c] sm:$0xf]
    %v129 = vld [vmem:[#allocation2 + $0x120] sm:$0xf]
    %v130 = vld [vmem:[#allocation2 + $0x124] sm:$0xf]
    %v131 = vld [vmem:[#allocation2 + $0x128] sm:$0xf]
    %v132 = vld [vmem:[#allocation2 + $0x12c] sm:$0xf]
    %v133 = vld [vmem:[#allocation2 + $0x130] sm:$0xf]
    %v134 = vld [vmem:[#allocation2 + $0x134] sm:$0xf]
    %v135 = vld [vmem:[#allocation2 + $0x138] sm:$0xf]
    %v136 = vld [vmem:[#allocation2 + $0x13c] sm:$0xf]
    %v137 = vld [vmem:[#allocation2 + $0x140] sm:$0xf]
    %v138 = vld [vmem:[#allocation2 + $0x144] sm:$0xf]
    %v139 = vld [vmem:[#allocation2 + $0x148] sm:$0xf]
    %v140 = vld [vmem:[#allocation2 + $0x14c] sm:$0xf]
    %v141 = vld [vmem:[#allocation2 + $0x150] sm:$0xf]
    %v142 = vld [vmem:[#allocation2 + $0x154] sm:$0xf]
    %v143 = vld [vmem:[#allocation2 + $0x158] sm:$0xf]
    %v144 = vld [vmem:[#allocation2 + $0x15c] sm:$0xf]
    %v145 = vld [vmem:[#allocation2 + $0x160] sm:$0xf]
    %v146 = vld [vmem:[#allocation2 + $0x164] sm:$0xf]
    %v147 = vld [vmem:[#allocation2 + $0x168] sm:$0xf]
    %v148 = vld [vmem:[#allocation2 + $0x16c] sm:$0xf]
    %v149 = vld [vmem:[#allocation2 + $0x170] sm:$0xf]
    %v150 = vld [vmem:[#allocation2 + $0x174] sm:$0xf]
    %v151 = vld [vmem:[#allocation2 + $0x178] sm:$0xf]
    %v152 = vld [vmem:[#allocation2 + $0x17c] sm:$0xf]
    %v153 = vld [vmem:[#allocation2 + $0x180] sm:$0xf]
    %v154 = vld [vmem:[#allocation2 + $0x184] sm:$0xf]
    %v155 = vld [vmem:[%s2] sm:$0x1]
    %v157 = vlaneseq
    %v158 = vshrl.u32 %v157, 7
    %v159 = vsub.s32 0, %v158
    %v160 = vrot.slane %v155, %v159
    %v260 = vunpack.c.l.b16 %v57
    %v261 = vunpack.c.l.b16 %v58
    %v262 = vunpack.c.l.b16 %v59
    %v263 = vunpack.c.l.b16 %v60
    %v264 = vunpack.c.l.b16 %v61
    %v265 = vunpack.c.l.b16 %v62
    %v266 = vunpack.c.l.b16 %v63
    %v267 = vunpack.c.l.b16 %v64
    %v268 = vunpack.c.l.b16 %v65
    %v269 = vunpack.c.l.b16 %v66
    %v270 = vunpack.c.l.b16 %v67
    %v271 = vunpack.c.l.b16 %v68
    %v272 = vunpack.c.l.b16 %v69
    %v273 = vunpack.c.l.b16 %v70
    %v274 = vunpack.c.l.b16 %v71
    %v275 = vunpack.c.l.b16 %v72
    %v276 = vunpack.c.l.b16 %v73
    %v277 = vunpack.c.l.b16 %v74
    %v278 = vunpack.c.l.b16 %v75
    %v279 = vunpack.c.l.b16 %v76
    %v280 = vunpack.c.l.b16 %v77
    %v281 = vunpack.c.l.b16 %v78
    %v282 = vunpack.c.l.b16 %v79
    %v283 = vunpack.c.l.b16 %v80
    %v284 = vunpack.c.l.b16 %v81
    %v285 = vunpack.c.l.b16 %v82
    %v286 = vunpack.c.l.b16 %v83
    %v287 = vunpack.c.l.b16 %v84
    %v288 = vunpack.c.l.b16 %v85
    %v289 = vunpack.c.l.b16 %v86
    %v290 = vunpack.c.l.b16 %v87
    %v291 = vunpack.c.l.b16 %v88
    %v292 = vunpack.c.l.b16 %v89
    %v293 = vunpack.c.l.b16 %v90
    %v294 = vunpack.c.l.b16 %v91
    %v295 = vunpack.c.l.b16 %v92
    %v296 = vunpack.c.l.b16 %v93
    %v297 = vunpack.c.l.b16 %v94
    %v298 = vunpack.c.l.b16 %v95
    %v299 = vunpack.c.l.b16 %v96
    %v300 = vunpack.c.l.b16 %v97
    %v301 = vunpack.c.l.b16 %v98
    %v302 = vunpack.c.l.b16 %v99
    %v303 = vunpack.c.l.b16 %v100
    %v304 = vunpack.c.l.b16 %v101
    %v305 = vunpack.c.l.b16 %v102
    %v306 = vunpack.c.l.b16 %v103
    %v307 = vunpack.c.l.b16 %v104
    %v308 = vunpack.c.l.b16 %v105
    %v309 = vunpack.c.l.b16 %v106
    %v310 = vunpack.c.l.b16 %v107
    %v311 = vunpack.c.l.b16 %v108
    %v312 = vunpack.c.l.b16 %v109
    %v313 = vunpack.c.l.b16 %v110
    %v314 = vunpack.c.l.b16 %v111
    %v315 = vunpack.c.l.b16 %v112
    %v316 = vunpack.c.l.b16 %v113
    %v317 = vunpack.c.l.b16 %v114
    %v318 = vunpack.c.l.b16 %v115
    %v319 = vunpack.c.l.b16 %v116
    %v320 = vunpack.c.l.b16 %v117
    %v321 = vunpack.c.l.b16 %v118
    %v322 = vunpack.c.l.b16 %v119
    %v323 = vunpack.c.l.b16 %v120
    %v324 = vunpack.c.l.b16 %v121
    %v325 = vunpack.c.l.b16 %v122
    %v326 = vunpack.c.l.b16 %v123
    %v327 = vunpack.c.l.b16 %v124
    %v328 = vunpack.c.l.b16 %v125
    %v329 = vunpack.c.l.b16 %v126
    %v330 = vunpack.c.l.b16 %v127
    %v331 = vunpack.c.l.b16 %v128
    %v332 = vunpack.c.l.b16 %v129
    %v333 = vunpack.c.l.b16 %v130
    %v334 = vunpack.c.l.b16 %v131
    %v335 = vunpack.c.l.b16 %v132
    %v336 = vunpack.c.l.b16 %v133
    %v337 = vunpack.c.l.b16 %v134
    %v338 = vunpack.c.l.b16 %v135
    %v339 = vunpack.c.l.b16 %v136
    %v340 = vunpack.c.l.b16 %v137
    %v341 = vunpack.c.l.b16 %v138
    %v342 = vunpack.c.l.b16 %v139
    %v343 = vunpack.c.l.b16 %v140
    %v344 = vunpack.c.l.b16 %v141
    %v345 = vunpack.c.l.b16 %v142
    %v346 = vunpack.c.l.b16 %v143
    %v347 = vunpack.c.l.b16 %v144
    %v348 = vunpack.c.l.b16 %v145
    %v349 = vunpack.c.l.b16 %v146
    %v350 = vunpack.c.l.b16 %v147
    %v351 = vunpack.c.l.b16 %v148
    %v352 = vunpack.c.l.b16 %v149
    %v353 = vunpack.c.l.b16 %v150
    %v354 = vunpack.c.l.b16 %v151
    %v355 = vunpack.c.l.b16 %v152
    %v356 = vunpack.c.l.b16 %v153
    %v357 = vunpack.c.l.b16 %v154
    %v358 = vpack.c.b16 %v261, %v260
    %v359 = vpack.c.b16 %v263, %v262
    %v360 = vpack.c.b16 %v265, %v264
    %v361 = vpack.c.b16 %v267, %v266
    %v362 = vpack.c.b16 %v269, %v268
    %v363 = vpack.c.b16 %v271, %v270
    %v364 = vpack.c.b16 %v273, %v272
    %v365 = vpack.c.b16 %v275, %v274
    %v366 = vpack.c.b16 %v277, %v276
    %v367 = vpack.c.b16 %v279, %v278
    %v368 = vpack.c.b16 %v281, %v280
    %v369 = vpack.c.b16 %v283, %v282
    %v370 = vpack.c.b16 %v285, %v284
    %v371 = vpack.c.b16 %v287, %v286
    %v372 = vpack.c.b16 %v289, %v288
    %v373 = vpack.c.b16 %v291, %v290
    %v374 = vpack.c.b16 %v293, %v292
    %v375 = vpack.c.b16 %v295, %v294
    %v376 = vpack.c.b16 %v297, %v296
    %v377 = vpack.c.b16 %v299, %v298
    %v378 = vpack.c.b16 %v301, %v300
    %v379 = vpack.c.b16 %v303, %v302
    %v380 = vpack.c.b16 %v305, %v304
    %v381 = vpack.c.b16 %v307, %v306
    %v382 = vpack.c.b16 %v309, %v308
    %v383 = vpack.c.b16 %v311, %v310
    %v384 = vpack.c.b16 %v313, %v312
    %v385 = vpack.c.b16 %v315, %v314
    %v386 = vpack.c.b16 %v317, %v316
    %v387 = vpack.c.b16 %v319, %v318
    %v388 = vpack.c.b16 %v321, %v320
    %v389 = vpack.c.b16 %v323, %v322
    %v390 = vpack.c.b16 %v325, %v324
    %v391 = vpack.c.b16 %v327, %v326
    %v392 = vpack.c.b16 %v329, %v328
    %v393 = vpack.c.b16 %v331, %v330
    %v394 = vpack.c.b16 %v333, %v332
    %v395 = vpack.c.b16 %v335, %v334
    %v396 = vpack.c.b16 %v337, %v336
    %v397 = vpack.c.b16 %v339, %v338
    %v398 = vpack.c.b16 %v341, %v340
    %v399 = vpack.c.b16 %v343, %v342
    %v400 = vpack.c.b16 %v345, %v344
    %v401 = vpack.c.b16 %v347, %v346
    %v402 = vpack.c.b16 %v349, %v348
    %v403 = vpack.c.b16 %v351, %v350
    %v404 = vpack.c.b16 %v353, %v352
    %v405 = vpack.c.b16 %v355, %v354
    %v406 = vpack.c.b16 %v357, %v356
    %vm456 = vcmask 130048
    %v458 = vsel %vm456, %v56, 0
    %460 = vmatprep.subr.bf16.mxu0 0
    %461 = vmatpush1.bf16.msra.mxu0 %v358
    %462 = vmatprep.subr.bf16.mxu0 0
    %463 = vmatpush1.bf16.msra.mxu0 %v359
    %464 = vmatprep.subr.bf16.mxu0 0
    %465 = vmatpush1.bf16.msra.mxu0 %v360
    %466 = vmatprep.subr.bf16.mxu0 0
    %467 = vmatpush1.bf16.msra.mxu0 %v361
    %468 = vmatprep.subr.bf16.mxu0 0
    %469 = vmatpush1.bf16.msra.mxu0 %v362
    %470 = vmatprep.subr.bf16.mxu0 0
    %471 = vmatpush1.bf16.msra.mxu0 %v363
    %472 = vmatprep.subr.bf16.mxu0 0
    %473 = vmatpush1.bf16.msra.mxu0 %v364
    %474 = vmatprep.subr.bf16.mxu0 0
    %475 = vmatpush1.bf16.msra.mxu0 %v365
    %476 = vmatprep.subr.bf16.mxu0 0
    %477 = vmatpush1.bf16.msra.mxu0 %v366
    %478 = vmatprep.subr.bf16.mxu0 0
    %479 = vmatpush1.bf16.msra.mxu0 %v367
    %480 = vmatprep.subr.bf16.mxu0 0
    %481 = vmatpush1.bf16.msra.mxu0 %v368
    %482 = vmatprep.subr.bf16.mxu0 0
    %483 = vmatpush1.bf16.msra.mxu0 %v369
    %484 = vmatprep.subr.bf16.mxu0 0
    %485 = vmatpush1.bf16.msra.mxu0 %v370
    %486 = vmatprep.subr.bf16.mxu0 0
    %487 = vmatpush1.bf16.msra.mxu0 %v371
    %488 = vmatprep.subr.bf16.mxu0 0
    %489 = vmatpush1.bf16.msra.mxu0 %v372
    %490 = vmatprep.subr.bf16.mxu0 0
    %491 = vmatpush1.bf16.msra.mxu0 %v373
    %492 = vmatprep.mubr.bf16.mxu0 %v51
    %493 = vmatmul.mubr.bf16.gmra.mrb[0].mxu0 %v50
    %v494 = vpop.f32.mrb[0].mxu0
    %v495 = vadd.f32 %v160, %v494
    %v496 = vpop.f32.mrb[0].mxu0
    %v497 = vpop.f32.mrb[0].mxu0
    %v498 = vadd.f32 %v160, %v497
    %v499 = vpop.f32.mrb[0].mxu0
    %500 = vdwg.mxu0
    %501 = vmatprep.subr.bf16.mxu0 0
    %502 = vmatpush1.bf16.msra.mxu0 %v374
    %503 = vmatprep.subr.bf16.mxu0 0
    %504 = vmatpush1.bf16.msra.mxu0 %v375
    %505 = vmatprep.subr.bf16.mxu0 0
    %506 = vmatpush1.bf16.msra.mxu0 %v376
    %507 = vmatprep.subr.bf16.mxu0 0
    %508 = vmatpush1.bf16.msra.mxu0 %v377
    %509 = vmatprep.subr.bf16.mxu0 0
    %510 = vmatpush1.bf16.msra.mxu0 %v378
    %511 = vmatprep.subr.bf16.mxu0 0
    %512 = vmatpush1.bf16.msra.mxu0 %v379
    %513 = vmatprep.subr.bf16.mxu0 0
    %514 = vmatpush1.bf16.msra.mxu0 %v380
    %515 = vmatprep.subr.bf16.mxu0 0
    %516 = vmatpush1.bf16.msra.mxu0 %v381
    %517 = vmatprep.subr.bf16.mxu0 0
    %518 = vmatpush1.bf16.msra.mxu0 %v382
    %519 = vmatprep.subr.bf16.mxu0 0
    %520 = vmatpush1.bf16.msra.mxu0 %v383
    %521 = vmatprep.subr.bf16.mxu0 0
    %522 = vmatpush1.bf16.msra.mxu0 %v384
    %523 = vmatprep.subr.bf16.mxu0 0
    %524 = vmatpush1.bf16.msra.mxu0 %v385
    %525 = vmatprep.subr.bf16.mxu0 0
    %526 = vmatpush1.bf16.msra.mxu0 %v386
    %527 = vmatprep.subr.bf16.mxu0 0
    %528 = vmatpush1.bf16.msra.mxu0 %v387
    %529 = vmatprep.subr.bf16.mxu0 0
    %530 = vmatpush1.bf16.msra.mxu0 %v388
    %531 = vmatprep.subr.bf16.mxu0 0
    %532 = vmatpush1.bf16.msra.mxu0 %v389
    %533 = vmatprep.mubr.bf16.mxu0 %v53
    %534 = vmatmul.mubr.bf16.gmra.mrb[0].mxu0 %v52
    %v535 = vpop.f32.mrb[0].mxu0
    %v536 = vadd.f32 %v495, %v535
    %v537 = vpop.f32.mrb[0].mxu0
    %v538 = vpop.f32.mrb[0].mxu0
    %v539 = vadd.f32 %v498, %v538
    %v540 = vpop.f32.mrb[0].mxu0
    %541 = vdwg.mxu0
    %542 = vmatprep.subr.bf16.mxu0 0
    %543 = vmatpush1.bf16.msra.mxu0 %v390
    %544 = vmatprep.subr.bf16.mxu0 0
    %545 = vmatpush1.bf16.msra.mxu0 %v391
    %546 = vmatprep.subr.bf16.mxu0 0
    %547 = vmatpush1.bf16.msra.mxu0 %v392
    %548 = vmatprep.subr.bf16.mxu0 0
    %549 = vmatpush1.bf16.msra.mxu0 %v393
    %550 = vmatprep.subr.bf16.mxu0 0
    %551 = vmatpush1.bf16.msra.mxu0 %v394
    %552 = vmatprep.subr.bf16.mxu0 0
    %553 = vmatpush1.bf16.msra.mxu0 %v395
    %554 = vmatprep.subr.bf16.mxu0 0
    %555 = vmatpush1.bf16.msra.mxu0 %v396
    %556 = vmatprep.subr.bf16.mxu0 0
    %557 = vmatpush1.bf16.msra.mxu0 %v397
    %558 = vmatprep.subr.bf16.mxu0 0
    %559 = vmatpush1.bf16.msra.mxu0 %v398
    %560 = vmatprep.subr.bf16.mxu0 0
    %561 = vmatpush1.bf16.msra.mxu0 %v399
    %562 = vmatprep.subr.bf16.mxu0 0
    %563 = vmatpush1.bf16.msra.mxu0 %v400
    %564 = vmatprep.subr.bf16.mxu0 0
    %565 = vmatpush1.bf16.msra.mxu0 %v401
    %566 = vmatprep.subr.bf16.mxu0 0
    %567 = vmatpush1.bf16.msra.mxu0 %v402
    %568 = vmatprep.subr.bf16.mxu0 0
    %569 = vmatpush1.bf16.msra.mxu0 %v403
    %570 = vmatprep.subr.bf16.mxu0 0
    %571 = vmatpush1.bf16.msra.mxu0 %v404
    %572 = vmatprep.subr.bf16.mxu0 0
    %573 = vmatpush1.bf16.msra.mxu0 %v405
    %574 = vmatprep.mubr.bf16.mxu0 %v55
    %575 = vmatmul.mubr.bf16.gmra.mrb[0].mxu0 %v54
    %v576 = vpop.f32.mrb[0].mxu0
    %v577 = vadd.f32 %v536, %v576
    %v578 = vpop.f32.mrb[0].mxu0
    %v579 = vpop.f32.mrb[0].mxu0
    %v580 = vadd.f32 %v539, %v579
    %v581 = vpop.f32.mrb[0].mxu0
    %582 = vdwg.mxu0
    %583 = vmatprep.subr.bf16.mxu0 0
    %584 = vmatpush1.bf16.msra.mxu0 %v406
    %585 = vmatprep.subr.bf16.mxu0 0
    %586 = vmatpush1.bf16.msra.mxu0 0
    %587 = vmatprep.subr.bf16.mxu0 0
    %588 = vmatpush1.bf16.msra.mxu0 0
    %589 = vmatprep.subr.bf16.mxu0 0
    %590 = vmatpush1.bf16.msra.mxu0 0
    %591 = vmatprep.subr.bf16.mxu0 0
    %592 = vmatpush1.bf16.msra.mxu0 0
    %593 = vmatprep.subr.bf16.mxu0 0
    %594 = vmatpush1.bf16.msra.mxu0 0
    %595 = vmatprep.subr.bf16.mxu0 0
    %596 = vmatpush1.bf16.msra.mxu0 0
    %597 = vmatprep.subr.bf16.mxu0 0
    %598 = vmatpush1.bf16.msra.mxu0 0
    %599 = vmatprep.subr.bf16.mxu0 0
    %600 = vmatpush1.bf16.msra.mxu0 0
    %601 = vmatprep.subr.bf16.mxu0 0
    %602 = vmatpush1.bf16.msra.mxu0 0
    %603 = vmatprep.subr.bf16.mxu0 0
    %604 = vmatpush1.bf16.msra.mxu0 0
    %605 = vmatprep.subr.bf16.mxu0 0
    %606 = vmatpush1.bf16.msra.mxu0 0
    %607 = vmatprep.subr.bf16.mxu0 0
    %608 = vmatpush1.bf16.msra.mxu0 0
    %609 = vmatprep.subr.bf16.mxu0 0
    %610 = vmatpush1.bf16.msra.mxu0 0
    %611 = vmatprep.subr.bf16.mxu0 0
    %612 = vmatpush1.bf16.msra.mxu0 0
    %613 = vmatprep.subr.bf16.mxu0 0
    %614 = vmatpush1.bf16.msra.mxu0 0
    %615 = vmatprep.mubr.bf16.mxu0 0
    %616 = vmatmul.mubr.bf16.gmra.mrb[0].mxu0 %v458
    %v617 = vpop.f32.mrb[0].mxu0
    %v618 = vadd.f32 %v577, %v617
    %v619 = vpop.f32.mrb[0].mxu0
    %v620 = vpop.f32.mrb[0].mxu0
    %v621 = vadd.f32 %v580, %v620
    %v622 = vpop.f32.mrb[0].mxu0
    %623 = vdwg.mxu0
    %v624 = vmax.f32 %v618, 0.0
    %v625 = vmax.f32 %v621, 0.0
    %v626 = vpack.c.bf16 %v625, %v624
    %v627 = vld [vmem:[%s3] sm:$0xf]
    %v628 = vld [vmem:[%s3 + $0x4] sm:$0xf]
    %v629 = vld [vmem:[%s3 + $0x8] sm:$0xf]
    %v630 = vld [vmem:[%s3 + $0xc] sm:$0xf]
    %v631 = vld [vmem:[%s3 + $0x10] sm:$0xf]
    %v632 = vld [vmem:[%s3 + $0x14] sm:$0xf]
    %v633 = vld [vmem:[%s3 + $0x18] sm:$0xf]
    %v634 = vld [vmem:[%s3 + $0x1c] sm:$0xf]
    %v635 = vld [vmem:[%s3 + $0x20] sm:$0xf]
    %v636 = vld [vmem:[%s3 + $0x24] sm:$0xf]
    %v637 = vld [vmem:[%s3 + $0x28] sm:$0xf]
    %v638 = vld [vmem:[%s3 + $0x2c] sm:$0xf]
    %v639 = vld [vmem:[%s3 + $0x30] sm:$0xf]
    %v640 = vld [vmem:[%s3 + $0x34] sm:$0xf]
    %v641 = vld [vmem:[%s3 + $0x38] sm:$0xf]
    %v642 = vld [vmem:[%s3 + $0x3c] sm:$0xf]
    %v643 = vld [vmem:[%s4] sm:$0x1]
    %v645 = vlaneseq
    %v646 = vshrl.u32 %v645, 7
    %v647 = vsub.s32 0, %v646
    %v648 = vrot.slane %v643, %v647
    %v666 = vunpack.c.l.b16 %v627
    %v667 = vunpack.c.l.b16 %v628
    %v668 = vunpack.c.l.b16 %v629
    %v669 = vunpack.c.l.b16 %v630
    %v670 = vunpack.c.l.b16 %v631
    %v671 = vunpack.c.l.b16 %v632
    %v672 = vunpack.c.l.b16 %v633
    %v673 = vunpack.c.l.b16 %v634
    %v674 = vunpack.c.l.b16 %v635
    %v675 = vunpack.c.l.b16 %v636
    %v676 = vunpack.c.l.b16 %v637
    %v677 = vunpack.c.l.b16 %v638
    %v678 = vunpack.c.l.b16 %v639
    %v679 = vunpack.c.l.b16 %v640
    %v680 = vunpack.c.l.b16 %v641
    %v681 = vunpack.c.l.b16 %v642
    %v682 = vpack.c.b16 %v667, %v666
    %v683 = vpack.c.b16 %v669, %v668
    %v684 = vpack.c.b16 %v671, %v670
    %v685 = vpack.c.b16 %v673, %v672
    %v686 = vpack.c.b16 %v675, %v674
    %v687 = vpack.c.b16 %v677, %v676
    %v688 = vpack.c.b16 %v679, %v678
    %v689 = vpack.c.b16 %v681, %v680
    %698 = vmatprep.subr.bf16.mxu0 0
    %699 = vmatpush1.bf16.msra.mxu0 %v682
    %700 = vmatprep.subr.bf16.mxu0 0
    %701 = vmatpush1.bf16.msra.mxu0 %v683
    %702 = vmatprep.subr.bf16.mxu0 0
    %703 = vmatpush1.bf16.msra.mxu0 %v684
    %704 = vmatprep.subr.bf16.mxu0 0
    %705 = vmatpush1.bf16.msra.mxu0 %v685
    %706 = vmatprep.subr.bf16.mxu0 0
    %707 = vmatpush1.bf16.msra.mxu0 %v686
    %708 = vmatprep.subr.bf16.mxu0 0
    %709 = vmatpush1.bf16.msra.mxu0 %v687
    %710 = vmatprep.subr.bf16.mxu0 0
    %711 = vmatpush1.bf16.msra.mxu0 %v688
    %712 = vmatprep.subr.bf16.mxu0 0
    %713 = vmatpush1.bf16.msra.mxu0 %v689
    %714 = vmatprep.subr.bf16.mxu0 0
    %715 = vmatpush1.bf16.msra.mxu0 0
    %716 = vmatprep.subr.bf16.mxu0 0
    %717 = vmatpush1.bf16.msra.mxu0 0
    %718 = vmatprep.subr.bf16.mxu0 0
    %719 = vmatpush1.bf16.msra.mxu0 0
    %720 = vmatprep.subr.bf16.mxu0 0
    %721 = vmatpush1.bf16.msra.mxu0 0
    %722 = vmatprep.subr.bf16.mxu0 0
    %723 = vmatpush1.bf16.msra.mxu0 0
    %724 = vmatprep.subr.bf16.mxu0 0
    %725 = vmatpush1.bf16.msra.mxu0 0
    %726 = vmatprep.subr.bf16.mxu0 0
    %727 = vmatpush1.bf16.msra.mxu0 0
    %728 = vmatprep.subr.bf16.mxu0 0
    %729 = vmatpush1.bf16.msra.mxu0 0
    %730 = vmatprep.mubr.bf16.mxu0 0
    %731 = vmatmul.mubr.bf16.gmra.mrb[0].mxu0 %v626
    %v732 = vpop.f32.mrb[0].mxu0
    %v733 = vadd.f32 %v648, %v732
    %v734 = vpop.f32.mrb[0].mxu0
    %v735 = vpop.f32.mrb[0].mxu0
    %v736 = vadd.f32 %v648, %v735
    %v737 = vpop.f32.mrb[0].mxu0
    %738 = vdwg.mxu0
    %vm739 = vcmask 80896
    %740 = vst.msk [vmem:[#allocation5] sm:$0xff] %vm739, %v733
    %741 = vst.msk [vmem:[#allocation5 + $0x8] sm:$0xff] %vm739, %v736
    // Predicated region
    $region26: #{tpu_custom_call.1} parent=1 // pred_check
      _
    $region27: #{tpu_custom_call.1} parent=1 // pred_check_branch
      %743 = sbr.rel (0) target = $region29
    $region28: #{tpu_custom_call.1} parent=1 // pred_region
      %s745 = ssub.s32 256, 128
      %746 = vsyncadd [#allocation4], %s745
      %s747 = sshll.u32 [#allocation5], 4
      %s748 = int_to_ptr.vmem [resolvable:$true] %s747
      %753 = dma.vmem_to_hbm [thread:$0]  %s748, 128, %s5, [#allocation4], 128, 128, 8
    $region29: #{tpu_custom_call.1} parent=1 // pred_fallthru
      _
    // Predicated region
    $region30: #{tpu_custom_call.1} parent=1 // pred_check
      _
    $region31: #{tpu_custom_call.1} parent=1 // pred_check_branch
      %755 = sbr.rel (0) target = $region33
    $region32: #{tpu_custom_call.1} parent=1 // pred_region
      %756 = dma.done [#allocation4], 256
    $region33: #{tpu_custom_call.1} parent=1 // pred_fallthru
      _
    %757 = vsyncpa [#allocation3], 1
    %758 = vsyncpa [#allocation4], 1

</llo_original>
